<compile_context>
chip_gen: v7x
topology: tpu7x:2x2x1
jax: 0.10.0
libtpu: 0.0.40
codegen_flags: <defaults>
</compile_context>

<pallas_src>
import jax
import jax.numpy as jnp
from jax.experimental import pallas as pl
from jax.experimental.pallas import tpu as pltpu

# ---------------- small, module-consistent configuration ----------------
IMG = 16          # img_size
PATCH = 4         # patch_size
IN_CH = 3         # in_chans (module default)
EMBED = 32        # embed_dim
GRID_HW = IMG // PATCH            # 4 patches per side
N_PATCH = GRID_HW * GRID_HW       # 16 patches
K_RAW = IN_CH * PATCH * PATCH     # 48 = contraction dim of the conv-as-matmul

MAX_TILE_M = 512  # rows per grid step (multiple of 8); full M if smaller


# ---------------- Pallas kernel ----------------
def _patch_proj_kernel(x_ref, w_ref, b_ref, o_ref):
    # (TILE_M, K) @ (K, D) + b  — bf16 operands, f32 MXU accumulation,
    # un-padded (TILE_M, 32) output block.
    acc = jnp.dot(x_ref[...], w_ref[...], preferred_element_type=jnp.float32)
    o_ref[...] = acc + b_ref[...]


# ---------------- parameter init (deterministic, synthetic) ----------------
def init_params(key):
    wkey, _ = jax.random.split(key)
    # Conv2d weight layout (D, C, ph, pw), std=0.02; bias zero.
    w_conv = jax.random.normal(wkey, (EMBED, IN_CH, PATCH, PATCH), jnp.float32) * 0.02
    b_conv = jnp.zeros((EMBED,), jnp.float32)

    # conv(kernel=stride=p)  <=>  matmul with weight (C*p*p, D).
    w_mat = w_conv.reshape(EMBED, K_RAW).T            # (48, 32), f32
    return {
        "w_conv": w_conv,                             # f32, for the conv reference
        "b_conv": b_conv,
        "w_bf16": w_mat.astype(jnp.bfloat16),         # kernel weight, cast ONCE here
        "b_row": b_conv.reshape(1, EMBED),            # (1, 32) f32 bias row
    }


# ---------------- forward ----------------
def forward(params, x):
    B, C, H, W = x.shape
    assert C == IN_CH and H == IMG and W == IMG, "input size must match the model"
    M = B * N_PATCH                                   # multiple of 16 -> no M padding

    # Space-to-depth patchification: ONE fused XLA copy (the bf16 cast fuses into
    # the same pass, halving the bytes the kernel has to DMA).  No K padding.
    patches = (
        x.reshape(B, C, GRID_HW, PATCH, GRID_HW, PATCH)
         .transpose(0, 2, 4, 1, 3, 5)                 # (B, Hp, Wp, C, P, P)
         .reshape(M, K_RAW)
         .astype(jnp.bfloat16)
    )

    tile_m = min(M, MAX_TILE_M)
    grid = (pl.cdiv(M, tile_m),)

    out = pl.pallas_call(
        _patch_proj_kernel,
        out_shape=jax.ShapeDtypeStruct((M, EMBED), jnp.float32),
        grid_spec=pltpu.PrefetchScalarGridSpec(
            num_scalar_prefetch=0,
            grid=grid,
            in_specs=[
                pl.BlockSpec((tile_m, K_RAW), lambda i: (i, 0)),   # activations
                pl.BlockSpec((K_RAW, EMBED), lambda i: (0, 0)),    # weight (VMEM-resident)
                pl.BlockSpec((1, EMBED), lambda i: (0, 0)),        # bias
            ],
            out_specs=pl.BlockSpec((tile_m, EMBED), lambda i: (i, 0)),
        ),
        compiler_params=pltpu.CompilerParams(
            dimension_semantics=("parallel",),        # pipelined; splits across v7x cores
        ),
    )(patches, params["w_bf16"], params["b_row"])

    # (M, D) -> (B, num_patches, D): leading-dim split, same physical tiling.
    return out.reshape(B, N_PATCH, EMBED)


# ---------------- pure-JAX reference (correctness check) ----------------
def forward_ref(params, x):
    y = jax.lax.conv_general_dilated(
        x, params["w_conv"], window_strides=(PATCH, PATCH), padding="VALID",
        dimension_numbers=("NCHW", "OIHW", "NCHW"))
    y = y + params["b_conv"][None, :, None, None]
    B = x.shape[0]
    return y.reshape(B, EMBED, N_PATCH).transpose(0, 2, 1)


if __name__ == "__main__":
    key = jax.random.PRNGKey(0)
    pkey, xkey = jax.random.split(key)
    params = init_params(pkey)
    x = jax.random.normal(xkey, (2, IN_CH, IMG, IMG), jnp.float32)  # NCHW like PyTorch

    out = jax.block_until_ready(forward(params, x))
    assert out.shape == (2, N_PATCH, EMBED)
    assert bool(jnp.all(jnp.isfinite(out)))

    # bf16 operands / f32 accumulation -> relaxed tolerance vs. the f32 conv ref.
    ref = forward_ref(params, x)
    assert bool(jnp.allclose(out, ref, rtol=2e-2, atol=2e-2)), \
        float(jnp.max(jnp.abs(out - ref)))
    print("KERNEL_OK")
</pallas_src>

<mosaic_0001>
module attributes {stable_mosaic.version = 11 : i64} {
  func.func @_patch_proj_kernel(%arg0: i32, %arg1: memref<32x48xbf16, #tpu.memory_space<vmem>>, %arg2: memref<48x32xbf16, #tpu.memory_space<vmem>>, %arg3: memref<1x32xf32, #tpu.memory_space<vmem>>, %arg4: memref<32x32xf32, #tpu.memory_space<vmem>>) attributes {dimension_semantics = [#tpu.dimension_semantics<parallel>], iteration_bounds = array<i64: 1>, scalar_prefetch = 0 : i64, scratch_operands = 0 : i64, tpu.core_type = #tpu.core_type<tc>, window_params = [{transform_indices = @transform_0, window_bounds = array<i64: 32, 48>}, {pipeline_mode = #tpu.pipeline_mode<synchronous>, transform_indices = @transform_1, window_bounds = array<i64: 48, 32>}, {pipeline_mode = #tpu.pipeline_mode<synchronous>, transform_indices = @transform_2, window_bounds = array<i64: 1, 32>}, {transform_indices = @transform_3, window_bounds = array<i64: 32, 32>}]} {
    %c0 = arith.constant 0 : index
    %c0_0 = arith.constant 0 : index
    %0 = vector.load %arg1[%c0, %c0_0] : memref<32x48xbf16, #tpu.memory_space<vmem>>, vector<32x48xbf16>
    %c0_1 = arith.constant 0 : index
    %c0_2 = arith.constant 0 : index
    %1 = vector.load %arg2[%c0_1, %c0_2] : memref<48x32xbf16, #tpu.memory_space<vmem>>, vector<48x32xbf16>
    %cst = arith.constant dense<0.000000e+00> : vector<32x32xf32>
    %2 = tpu.matmul %0, %1, %cst {dimension_numbers = #tpu.dot_dimension_numbers<[1], [0], [0], [1], [0, 0, 1, 1], [], []>} : vector<32x48xbf16>, vector<48x32xbf16>, vector<32x32xf32> -> vector<32x32xf32>
    %c0_3 = arith.constant 0 : index
    %c0_4 = arith.constant 0 : index
    %3 = vector.load %arg3[%c0_3, %c0_4] : memref<1x32xf32, #tpu.memory_space<vmem>>, vector<1x32xf32>
    %4 = vector.broadcast %3 : vector<1x32xf32> to vector<32x32xf32>
    %5 = arith.addf %2, %4 : vector<32x32xf32>
    %c0_5 = arith.constant 0 : index
    %c0_6 = arith.constant 0 : index
    %6 = vector.load %arg4[%c0_5, %c0_6] : memref<32x32xf32, #tpu.memory_space<vmem>>, vector<32x32xf32>
    tpu.vector_store %arg4[%c0_5, %c0_6], %5 {strides = array<i32>} : memref<32x32xf32, #tpu.memory_space<vmem>>, vector<32x32xf32>,
    return
  }
  func.func @transform_0(%arg0: i32) -> (i32, i32) {
    %c0_i32 = arith.constant 0 : i32
    %c0_i32_0 = arith.constant 0 : i32
    return %arg0, %c0_i32 : i32, i32
  }
  func.func @transform_1(%arg0: i32) -> (i32, i32) {
    %c0_i32 = arith.constant 0 : i32
    %c0_i32_0 = arith.constant 0 : i32
    %c0_i32_1 = arith.constant 0 : i32
    return %c0_i32, %c0_i32_0 : i32, i32
  }
  func.func @transform_2(%arg0: i32) -> (i32, i32) {
    %c0_i32 = arith.constant 0 : i32
    %c0_i32_0 = arith.constant 0 : i32
    %c0_i32_1 = arith.constant 0 : i32
    return %c0_i32, %c0_i32_0 : i32, i32
  }
  func.func @transform_3(%arg0: i32) -> (i32, i32) {
    %c0_i32 = arith.constant 0 : i32
    %c0_i32_0 = arith.constant 0 : i32
    return %arg0, %c0_i32 : i32, i32
  }
}

</mosaic_0001>

<llo_original>
// kernel: tpu_custom_call.1
$region0: #{tpu_custom_call.1}
  #allocation0 [shape = 'u32[]', space=smem, size = 0x4, offset = 0x4, fixed_abs, tag = 'smem constant byte address 0x4 - core index']
  #allocation1 [shape = 'u32[144,128]{1,0:T(1,128)}', space=vmem, size = 0x12000, scoped, tag = 'internal scratch']
  %s0 = inlined_call_operand.vmem [shape: bf16[32,48], index: 0, kind: input, shape index: {}]
  %s1 = inlined_call_operand.vmem [shape: bf16[48,32], index: 1, kind: input, shape index: {}]
  %s2 = inlined_call_operand.vmem [shape: f32[1,32], index: 2, kind: input, shape index: {}]
  %s3 = inlined_call_operand.hbm [shape: f32[32,32], index: 3, kind: output, shape index: {}]
  %s4 = sld [smem:[#allocation0]]
  $region22: #{tpu_custom_call.1} parent=0
    _
  %s6 = ssub.s32 1, %s4
  %s7 = scalar_select 0, %s6, %s4
  $region1: #{tpu_custom_call.1} parent=0
    #allocation2 [shape = 'u8[16384]{0}', space=vmem, size = 0x4000, scoped, tag = 'output window, operand 0, single buffered']
    #allocation3 [shape = 's32[1]{0}', space=sflag, size = 0x4, scoped, tag = 'scoped memory for tpu_custom_call.1']
    %8 = vsyncpa [#allocation3], 0
    // Predicated region
    $region2: #{tpu_custom_call.1} parent=1 // pred_check
      _
    $region3: #{tpu_custom_call.1} parent=1 // pred_check_branch
      %10 = sbr.rel (0) target = $region5
    $region4: #{tpu_custom_call.1} parent=1 // pred_region
      _
    $region5: #{tpu_custom_call.1} parent=1 // pred_fallthru
      _
    // Predicated region
    $region6: #{tpu_custom_call.1} parent=1 // pred_check
      _
    $region7: #{tpu_custom_call.1} parent=1 // pred_check_branch
      %12 = sbr.rel (0) target = $region9
    $region8: #{tpu_custom_call.1} parent=1 // pred_region
      _
    $region9: #{tpu_custom_call.1} parent=1 // pred_fallthru
      _
    // Predicated region
    $region10: #{tpu_custom_call.1} parent=1 // pred_check
      _
    $region11: #{tpu_custom_call.1} parent=1 // pred_check_branch
      %14 = sbr.rel (0) target = $region13
    $region12: #{tpu_custom_call.1} parent=1 // pred_region
      _
    $region13: #{tpu_custom_call.1} parent=1 // pred_fallthru
      _
    %v16 = vld [vmem:[%s0] sm:$0xf]
    %v17 = vld [vmem:[%s0 + $0x4] sm:$0xf]
    %v18 = vld [vmem:[%s0 + $0x8] sm:$0xf]
    %v19 = vld [vmem:[%s0 + $0xc] sm:$0xf]
    %v20 = vld [vmem:[%s1] sm:$0xf]
    %v21 = vld [vmem:[%s1 + $0x4] sm:$0xf]
    %v22 = vld [vmem:[%s1 + $0x8] sm:$0xf]
    %v23 = vld [vmem:[%s1 + $0xc] sm:$0xf]
    %v24 = vld [vmem:[%s1 + $0x10] sm:$0xf]
    %v25 = vld [vmem:[%s1 + $0x14] sm:$0xf]
    %v26 = vld [vmem:[%s2] sm:$0x1]
    %v28 = vlaneseq
    %v29 = vshrl.u32 %v28, 7
    %v30 = vsub.s32 0, %v29
    %v31 = vrot.slane %v26, %v30
    %v37 = vunpack.c.l.b16 %v16
    %v38 = vunpack.c.l.b16 %v17
    %v39 = vunpack.c.l.b16 %v18
    %v40 = vunpack.c.l.b16 %v19
    %v41 = vpack.c.b16 %v38, %v37
    %v42 = vpack.c.b16 %v40, %v39
    %v49 = vunpack.c.l.b16 %v20
    %v50 = vunpack.c.l.b16 %v21
    %v51 = vunpack.c.l.b16 %v22
    %v52 = vunpack.c.l.b16 %v23
    %v53 = vunpack.c.l.b16 %v24
    %v54 = vunpack.c.l.b16 %v25
    %v55 = vpack.c.b16 %v50, %v49
    %v56 = vpack.c.b16 %v52, %v51
    %v57 = vpack.c.b16 %v54, %v53
    %vm61 = vcmask 392192
    %v63 = vsel %vm61, %v41, 0
    %v66 = vsel %vm61, %v42, 0
    %68 = vmatprep.subr.bf16.mxu0 0
    %69 = vmatpush1.bf16.msra.mxu0 %v55
    %70 = vmatprep.subr.bf16.mxu0 0
    %71 = vmatpush1.bf16.msra.mxu0 %v56
    %72 = vmatprep.subr.bf16.mxu0 0
    %73 = vmatpush1.bf16.msra.mxu0 %v57
    %74 = vmatprep.subr.bf16.mxu0 0
    %75 = vmatpush1.bf16.msra.mxu0 0
    %76 = vmatprep.subr.bf16.mxu0 0
    %77 = vmatpush1.bf16.msra.mxu0 0
    %78 = vmatprep.subr.bf16.mxu0 0
    %79 = vmatpush1.bf16.msra.mxu0 0
    %80 = vmatprep.subr.bf16.mxu0 0
    %81 = vmatpush1.bf16.msra.mxu0 0
    %82 = vmatprep.subr.bf16.mxu0 0
    %83 = vmatpush1.bf16.msra.mxu0 0
    %84 = vmatprep.subr.bf16.mxu0 0
    %85 = vmatpush1.bf16.msra.mxu0 0
    %86 = vmatprep.subr.bf16.mxu0 0
    %87 = vmatpush1.bf16.msra.mxu0 0
    %88 = vmatprep.subr.bf16.mxu0 0
    %89 = vmatpush1.bf16.msra.mxu0 0
    %90 = vmatprep.subr.bf16.mxu0 0
    %91 = vmatpush1.bf16.msra.mxu0 0
    %92 = vmatprep.subr.bf16.mxu0 0
    %93 = vmatpush1.bf16.msra.mxu0 0
    %94 = vmatprep.subr.bf16.mxu0 0
    %95 = vmatpush1.bf16.msra.mxu0 0
    %96 = vmatprep.subr.bf16.mxu0 0
    %97 = vmatpush1.bf16.msra.mxu0 0
    %98 = vmatprep.subr.bf16.mxu0 0
    %99 = vmatpush1.bf16.msra.mxu0 0
    %100 = vmatprep.mubr.bf16.mxu0 0
    %101 = vmatmul.mubr.bf16.gmra.mrb[0].mxu0 %v63
    %v102 = vpop.f32.mrb[0].mxu0
    %v103 = vadd.f32 %v31, %v102
    %v104 = vpop.f32.mrb[0].mxu0
    %v105 = vpop.f32.mrb[0].mxu0
    %v106 = vadd.f32 %v31, %v105
    %v107 = vpop.f32.mrb[0].mxu0
    %108 = vmatprep.mubr.bf16.mxu0 0
    %109 = vmatmul.mubr.bf16.gmra.mrb[0].mxu0 %v66
    %v110 = vpop.f32.mrb[0].mxu0
    %v111 = vadd.f32 %v31, %v110
    %v112 = vpop.f32.mrb[0].mxu0
    %v113 = vpop.f32.mrb[0].mxu0
    %v114 = vadd.f32 %v31, %v113
    %v115 = vpop.f32.mrb[0].mxu0
    %116 = vdwg.mxu0
    %vm117 = vcmask 261120
    %118 = vst.msk [vmem:[#allocation2] sm:$0xff] %vm117, %v103
    %119 = vst.msk [vmem:[#allocation2 + $0x8] sm:$0xff] %vm117, %v106
    %120 = vst.msk [vmem:[#allocation2 + $0x10] sm:$0xff] %vm117, %v111
    %121 = vst.msk [vmem:[#allocation2 + $0x18] sm:$0xff] %vm117, %v114
    // Predicated region
    $region14: #{tpu_custom_call.1} parent=1 // pred_check
      _
    $region15: #{tpu_custom_call.1} parent=1 // pred_check_branch
      %123 = sbr.rel (0) target = $region17
    $region16: #{tpu_custom_call.1} parent=1 // pred_region
      %s125 = ssub.s32 512, 512
      %126 = vsyncadd [#allocation3], %s125
      %s127 = sshll.u32 [#allocation2], 4
      %s128 = int_to_ptr.vmem [resolvable:$true] %s127
      %133 = dma.vmem_to_hbm [thread:$0]  %s128, 512, %s3, [#allocation3], 128, 128, 8
    $region17: #{tpu_custom_call.1} parent=1 // pred_fallthru
      _
    // Predicated region
    $region18: #{tpu_custom_call.1} parent=1 // pred_check
      _
    $region19: #{tpu_custom_call.1} parent=1 // pred_check_branch
      %135 = sbr.rel (0) target = $region21
    $region20: #{tpu_custom_call.1} parent=1 // pred_region
      %136 = dma.done [#allocation3], 512
    $region21: #{tpu_custom_call.1} parent=1 // pred_fallthru
      _
    %137 = vsyncpa [#allocation3], 1

</llo_original>
